<compile_context>
chip_gen: v7x
topology: tpu7x:2x2x1
jax: 0.10.0
libtpu: 0.0.40
codegen_flags: <defaults>
</compile_context>

<pallas_src>
import jax
import jax.numpy as jnp
from jax.experimental import pallas as pl
from jax.experimental.pallas import tpu as pltpu

EPS = 1e-5


def textnn_kernel(x_ref, gamma_ref, beta_ref, w_ref, b_ref, o_ref):
    x = x_ref[...].astype(jnp.float32)                        # (N, D_in)

    # --- BatchNorm1d (training mode: batch stats, biased variance) ---
    mean = jnp.mean(x, axis=0, keepdims=True)                 # (1, D_in)
    centered = x - mean
    var = jnp.mean(centered * centered, axis=0, keepdims=True)
    inv_std = jax.lax.rsqrt(var + EPS)                        # EUP

    # Fold affine params into a single scale/shift: xbn = x * scale + shift.
    scale = inv_std * gamma_ref[...]
    shift = beta_ref[...] - mean * scale
    xbn = x * scale + shift                                   # (N, D_in), f32

    # --- Linear + ReLU: bf16 operands, f32 accumulation on the MXU ---
    y = jnp.dot(xbn.astype(jnp.bfloat16), w_ref[...],
                preferred_element_type=jnp.float32)           # (N, tn)
    y = y + b_ref[...]
    o_ref[...] = jnp.maximum(y, 0.0).astype(o_ref.dtype)


def _pick_tile_n(d_in, d_out):
    """Largest lane-dense (multiple of 128) D_out tile whose double-buffered
    bf16 W slab stays under ~16 MiB (safe headroom on v7x's 64 MiB VMEM)."""
    if d_out % 128 != 0:
        return d_out  # full extent always satisfies the (8,128) BlockSpec rule
    for cand in (2048, 1024, 512, 256, 128):
        if d_out % cand == 0 and 2 * d_in * cand * 2 <= (16 << 20):
            return cand
    return 128


def textnn_forward(x, gamma, beta, w, b, tile_n=None):
    n, d_in = x.shape
    d_out = w.shape[1]
    tn = tile_n if tile_n is not None else _pick_tile_n(d_in, d_out)
    assert d_out % tn == 0
    grid = (d_out // tn,)

    # Halve W's HBM->VMEM traffic; accumulation in the kernel stays f32.
    w_bf16 = w.astype(jnp.bfloat16)

    # VMEM budget: resident x/gamma/beta + double-buffered streamed tiles,
    # with slack, capped under v7x's 64 MiB physical VMEM.
    resident = n * d_in * 4 + 2 * d_in * 4
    streamed = d_in * tn * 2 + tn * 4 + n * tn * 4
    vmem_limit = int(min(max(2 * resident + 4 * streamed + (2 << 20), 4 << 20),
                         48 << 20))

    cost = pl.CostEstimate(
        flops=2 * n * d_in * d_out + 8 * n * d_in,
        transcendentals=d_in,
        bytes_accessed=(n * d_in * 4 + 2 * d_in * 4 + d_in * d_out * 2
                        + d_out * 4 + n * d_out * 4),
    )

    return pl.pallas_call(
        textnn_kernel,
        out_shape=jax.ShapeDtypeStruct((n, d_out), jnp.float32),
        grid=grid,
        in_specs=[
            pl.BlockSpec((n, d_in), lambda j: (0, 0)),       # x: full, resident
            pl.BlockSpec((1, d_in), lambda j: (0, 0)),       # gamma
            pl.BlockSpec((1, d_in), lambda j: (0, 0)),       # beta
            pl.BlockSpec((d_in, tn), lambda j: (0, j)),      # W: streamed tile
            pl.BlockSpec((1, tn), lambda j: (0, j)),         # bias tile
        ],
        out_specs=pl.BlockSpec((n, tn), lambda j: (0, j)),   # lane-dense output
        compiler_params=pltpu.CompilerParams(
            dimension_semantics=("parallel",),               # v7x: 2 TCs split columns
            vmem_limit_bytes=vmem_limit,
        ),
        cost_estimate=cost,
    )(x, gamma, beta, w_bf16, b)


def reference_forward(x, gamma, beta, w, b):
    mean = jnp.mean(x, axis=0, keepdims=True)
    var = jnp.mean((x - mean) ** 2, axis=0, keepdims=True)
    xhat = (x - mean) / jnp.sqrt(var + EPS)
    xbn = xhat * gamma + beta
    return jnp.maximum(xbn @ w + b, 0.0)


if __name__ == "__main__":
    # Small shapes consistent with the module: batch=8, input_dim=256,
    # output_dim=512.  We run the auto-tiled path (tn=512, 1-step grid) and a
    # forced tn=128 path (4-step grid) to exercise the D_out streaming.
    N, D_IN, D_OUT = 8, 256, 512
    key = jax.random.PRNGKey(0)
    kx, kw, kb = jax.random.split(key, 3)

    x = jax.random.normal(kx, (N, D_IN), dtype=jnp.float32)

    # BatchNorm1d affine params: PyTorch default init (gamma=1, beta=0).
    gamma = jnp.ones((1, D_IN), dtype=jnp.float32)
    beta = jnp.zeros((1, D_IN), dtype=jnp.float32)

    # Linear params: uniform(-1/sqrt(fan_in), 1/sqrt(fan_in)), stored as
    # (D_in, D_out) (transposed relative to torch's (out, in)).
    bound = 1.0 / (D_IN ** 0.5)
    w = jax.random.uniform(kw, (D_IN, D_OUT), jnp.float32, -bound, bound)
    b = jax.random.uniform(kb, (1, D_OUT), jnp.float32, -bound, bound)

    # TODO(synk): PyTorch BatchNorm1d training mode also updates running_mean/
    # running_var buffers (module state); the forward output does not depend
    # on them, so they are not modeled here.
    ref = reference_forward(x, gamma, beta, w, b)

    out_auto = jax.block_until_ready(textnn_forward(x, gamma, beta, w, b))
    out_tiled = jax.block_until_ready(
        textnn_forward(x, gamma, beta, w, b, tile_n=128))

    assert out_auto.shape == (N, D_OUT)
    assert out_tiled.shape == (N, D_OUT)
    # Tolerance loosened vs pure-f32 because matmul operands are bf16
    # (accumulation stays f32, so the error is bounded).
    assert jnp.allclose(out_auto, ref, atol=2e-2, rtol=2e-2), "auto-tile mismatch"
    assert jnp.allclose(out_tiled, ref, atol=2e-2, rtol=2e-2), "tn=128 mismatch"

    print("KERNEL_OK")
</pallas_src>

<mosaic_0001>
module attributes {stable_mosaic.version = 11 : i64} {
  func.func @textnn_kernel(%arg0: i32, %arg1: memref<8x256xf32, #tpu.memory_space<vmem>>, %arg2: memref<1x256xf32, #tpu.memory_space<vmem>>, %arg3: memref<1x256xf32, #tpu.memory_space<vmem>>, %arg4: memref<256x512xbf16, #tpu.memory_space<vmem>>, %arg5: memref<1x512xf32, #tpu.memory_space<vmem>>, %arg6: memref<8x512xf32, #tpu.memory_space<vmem>>) attributes {dimension_semantics = [#tpu.dimension_semantics<parallel>], iteration_bounds = array<i64: 1>, scalar_prefetch = 0 : i64, scratch_operands = 0 : i64, tpu.core_type = #tpu.core_type<tc>, window_params = [{pipeline_mode = #tpu.pipeline_mode<synchronous>, transform_indices = @transform_0, window_bounds = array<i64: 8, 256>}, {pipeline_mode = #tpu.pipeline_mode<synchronous>, transform_indices = @transform_1, window_bounds = array<i64: 1, 256>}, {pipeline_mode = #tpu.pipeline_mode<synchronous>, transform_indices = @transform_2, window_bounds = array<i64: 1, 256>}, {transform_indices = @transform_3, window_bounds = array<i64: 256, 512>}, {transform_indices = @transform_4, window_bounds = array<i64: 1, 512>}, {transform_indices = @transform_5, window_bounds = array<i64: 8, 512>}]} {
    %c0 = arith.constant 0 : index
    %c0_0 = arith.constant 0 : index
    %0 = vector.load %arg1[%c0, %c0_0] : memref<8x256xf32, #tpu.memory_space<vmem>>, vector<8x256xf32>
    %cst = arith.constant dense<0.000000e+00> : vector<256xf32>
    %1 = vector.multi_reduction <add>, %0, %cst [0] : vector<8x256xf32> to vector<256xf32>
    %2 = vector.shape_cast %1 : vector<256xf32> to vector<1x256xf32>
    %cst_1 = arith.constant 8.000000e+00 : f32
    %3 = vector.broadcast %cst_1 : f32 to vector<1x256xf32>
    %4 = arith.divf %2, %3 : vector<1x256xf32>
    %5 = vector.broadcast %4 : vector<1x256xf32> to vector<8x256xf32>
    %6 = arith.subf %0, %5 : vector<8x256xf32>
    %7 = arith.mulf %6, %6 : vector<8x256xf32>
    %cst_2 = arith.constant dense<0.000000e+00> : vector<256xf32>
    %8 = vector.multi_reduction <add>, %7, %cst_2 [0] : vector<8x256xf32> to vector<256xf32>
    %9 = vector.shape_cast %8 : vector<256xf32> to vector<1x256xf32>
    %cst_3 = arith.constant 8.000000e+00 : f32
    %10 = vector.broadcast %cst_3 : f32 to vector<1x256xf32>
    %11 = arith.divf %9, %10 : vector<1x256xf32>
    %cst_4 = arith.constant 9.99999974E-6 : f32
    %12 = vector.broadcast %cst_4 : f32 to vector<1x256xf32>
    %13 = arith.addf %11, %12 : vector<1x256xf32>
    %14 = math.rsqrt %13 : vector<1x256xf32>
    %c0_5 = arith.constant 0 : index
    %c0_6 = arith.constant 0 : index
    %15 = vector.load %arg2[%c0_5, %c0_6] : memref<1x256xf32, #tpu.memory_space<vmem>>, vector<1x256xf32>
    %16 = arith.mulf %14, %15 : vector<1x256xf32>
    %c0_7 = arith.constant 0 : index
    %c0_8 = arith.constant 0 : index
    %17 = vector.load %arg3[%c0_7, %c0_8] : memref<1x256xf32, #tpu.memory_space<vmem>>, vector<1x256xf32>
    %18 = arith.mulf %4, %16 : vector<1x256xf32>
    %19 = arith.subf %17, %18 : vector<1x256xf32>
    %20 = vector.broadcast %16 : vector<1x256xf32> to vector<8x256xf32>
    %21 = arith.mulf %0, %20 : vector<8x256xf32>
    %22 = vector.broadcast %19 : vector<1x256xf32> to vector<8x256xf32>
    %23 = arith.addf %21, %22 : vector<8x256xf32>
    %24 = arith.truncf %23 : vector<8x256xf32> to vector<8x256xbf16>
    %c0_9 = arith.constant 0 : index
    %c0_10 = arith.constant 0 : index
    %25 = vector.load %arg4[%c0_9, %c0_10] : memref<256x512xbf16, #tpu.memory_space<vmem>>, vector<256x512xbf16>
    %cst_11 = arith.constant dense<0.000000e+00> : vector<8x512xf32>
    %26 = tpu.matmul %24, %25, %cst_11 {dimension_numbers = #tpu.dot_dimension_numbers<[1], [0], [0], [1], [0, 0, 1, 1], [], []>} : vector<8x256xbf16>, vector<256x512xbf16>, vector<8x512xf32> -> vector<8x512xf32>
    %c0_12 = arith.constant 0 : index
    %c0_13 = arith.constant 0 : index
    %27 = vector.load %arg5[%c0_12, %c0_13] : memref<1x512xf32, #tpu.memory_space<vmem>>, vector<1x512xf32>
    %28 = vector.broadcast %27 : vector<1x512xf32> to vector<8x512xf32>
    %29 = arith.addf %26, %28 : vector<8x512xf32>
    %cst_14 = arith.constant 0.000000e+00 : f32
    %30 = vector.broadcast %cst_14 : f32 to vector<8x512xf32>
    %31 = arith.maximumf %29, %30 : vector<8x512xf32>
    %c0_15 = arith.constant 0 : index
    %c0_16 = arith.constant 0 : index
    %32 = vector.load %arg6[%c0_15, %c0_16] : memref<8x512xf32, #tpu.memory_space<vmem>>, vector<8x512xf32>
    tpu.vector_store %arg6[%c0_15, %c0_16], %31 {strides = array<i32>} : memref<8x512xf32, #tpu.memory_space<vmem>>, vector<8x512xf32>,
    return
  }
  func.func @transform_0(%arg0: i32) -> (i32, i32) {
    %c0_i32 = arith.constant 0 : i32
    %c0_i32_0 = arith.constant 0 : i32
    %c0_i32_1 = arith.constant 0 : i32
    return %c0_i32, %c0_i32_0 : i32, i32
  }
  func.func @transform_1(%arg0: i32) -> (i32, i32) {
    %c0_i32 = arith.constant 0 : i32
    %c0_i32_0 = arith.constant 0 : i32
    %c0_i32_1 = arith.constant 0 : i32
    return %c0_i32, %c0_i32_0 : i32, i32
  }
  func.func @transform_2(%arg0: i32) -> (i32, i32) {
    %c0_i32 = arith.constant 0 : i32
    %c0_i32_0 = arith.constant 0 : i32
    %c0_i32_1 = arith.constant 0 : i32
    return %c0_i32, %c0_i32_0 : i32, i32
  }
  func.func @transform_3(%arg0: i32) -> (i32, i32) {
    %c0_i32 = arith.constant 0 : i32
    %c0_i32_0 = arith.constant 0 : i32
    return %c0_i32, %arg0 : i32, i32
  }
  func.func @transform_4(%arg0: i32) -> (i32, i32) {
    %c0_i32 = arith.constant 0 : i32
    %c0_i32_0 = arith.constant 0 : i32
    return %c0_i32, %arg0 : i32, i32
  }
  func.func @transform_5(%arg0: i32) -> (i32, i32) {
    %c0_i32 = arith.constant 0 : i32
    %c0_i32_0 = arith.constant 0 : i32
    return %c0_i32, %arg0 : i32, i32
  }
}

</mosaic_0001>

<llo_original>
// kernel: tpu_custom_call.1
$region0: #{tpu_custom_call.1}
  #allocation0 [shape = 'u32[]', space=smem, size = 0x4, offset = 0x4, fixed_abs, tag = 'smem constant byte address 0x4 - core index']
  #allocation1 [shape = 'u32[144,128]{1,0:T(1,128)}', space=vmem, size = 0x12000, scoped, tag = 'internal scratch']
  %s0 = inlined_call_operand.hbm [shape: f32[8,256], index: 0, kind: input, shape index: {}]
  %s1 = inlined_call_operand.vmem [shape: f32[1,256], index: 1, kind: input, shape index: {}]
  %s2 = inlined_call_operand.hbm [shape: f32[1,256], index: 2, kind: input, shape index: {}]
  %s3 = inlined_call_operand.hbm [shape: bf16[256,512], index: 3, kind: input, shape index: {}]
  %s4 = inlined_call_operand.vmem [shape: f32[1,512], index: 4, kind: input, shape index: {}]
  %s5 = inlined_call_operand.hbm [shape: f32[8,512], index: 5, kind: output, shape index: {}]
  %s6 = sld [smem:[#allocation0]]
  $region42: #{tpu_custom_call.1} parent=0
    _
  %s8 = ssub.s32 1, %s6
  %s9 = scalar_select 0, %s8, %s6
  $region1: #{tpu_custom_call.1} parent=0
    #allocation2 [shape = 'u8[8192]{0}', space=vmem, size = 0x2000, scoped, tag = 'input window, operand 0, single buffered']
    #allocation3 [shape = 's32[1]{0}', space=sflag, size = 0x4, scoped, tag = 'scoped memory for tpu_custom_call.1']
    #allocation4 [shape = 's32[1]{0}', space=sflag, size = 0x4, scoped, tag = 'scoped memory for tpu_custom_call.1']
    #allocation5 [shape = 'u8[1024]{0}', space=vmem, size = 0x400, scoped, tag = 'input window, operand 2, single buffered']
    #allocation6 [shape = 's32[1]{0}', space=sflag, size = 0x4, scoped, tag = 'scoped memory for tpu_custom_call.1']
    #allocation7 [shape = 'u8[262144]{0}', space=vmem, size = 0x40000, scoped, tag = 'input window, operand 3, single buffered']
    #allocation8 [shape = 'u8[16384]{0}', space=vmem, size = 0x4000, scoped, tag = 'output window, operand 0, single buffered']
    %10 = vsyncpa [#allocation3], 0
    %11 = vsyncpa [#allocation6], 0
    %12 = vsyncpa [#allocation4], 0
    // Predicated region
    $region2: #{tpu_custom_call.1} parent=1 // pred_check
      _
    $region3: #{tpu_custom_call.1} parent=1 // pred_check_branch
      %14 = sbr.rel (0) target = $region5
    $region4: #{tpu_custom_call.1} parent=1 // pred_region
      %s16 = ssub.s32 256, 256
      %17 = vsyncadd [#allocation3], %s16
      %s19 = sshll.u32 [#allocation2], 4
      %s20 = int_to_ptr.vmem [resolvable:$true] %s19
      %22 = dma.hbm_to_vmem [thread:$0]  %s0, 256, %s20, [#allocation3]
    $region5: #{tpu_custom_call.1} parent=1 // pred_fallthru
      _
    // Predicated region
    $region6: #{tpu_custom_call.1} parent=1 // pred_check
      _
    $region7: #{tpu_custom_call.1} parent=1 // pred_check_branch
      %24 = sbr.rel (0) target = $region9
    $region8: #{tpu_custom_call.1} parent=1 // pred_region
      _
    $region9: #{tpu_custom_call.1} parent=1 // pred_fallthru
      _
    // Predicated region
    $region10: #{tpu_custom_call.1} parent=1 // pred_check
      _
    $region11: #{tpu_custom_call.1} parent=1 // pred_check_branch
      %26 = sbr.rel (0) target = $region13
    $region12: #{tpu_custom_call.1} parent=1 // pred_region
      %s28 = ssub.s32 32, 32
      %29 = vsyncadd [#allocation6], %s28
      %s31 = sshll.u32 [#allocation5], 4
      %s32 = int_to_ptr.vmem [resolvable:$true] %s31
      %34 = dma.hbm_to_vmem [thread:$0]  %s2, 32, %s32, [#allocation6]
    $region13: #{tpu_custom_call.1} parent=1 // pred_fallthru
      _
    // Predicated region
    $region14: #{tpu_custom_call.1} parent=1 // pred_check
      _
    $region15: #{tpu_custom_call.1} parent=1 // pred_check_branch
      %36 = sbr.rel (0) target = $region17
    $region16: #{tpu_custom_call.1} parent=1 // pred_region
      %s38 = ssub.s32 8192, 8192
      %39 = vsyncadd [#allocation6], %s38
      %s40 = sshll.u32 [#allocation7], 4
      %s41 = int_to_ptr.vmem [resolvable:$true] %s40
      %46 = dma.hbm_to_vmem [thread:$0]  %s3, 8192, %s41, [#allocation6], 256, 256, 16
    $region17: #{tpu_custom_call.1} parent=1 // pred_fallthru
      _
    // Predicated region
    $region18: #{tpu_custom_call.1} parent=1 // pred_check
      _
    $region19: #{tpu_custom_call.1} parent=1 // pred_check_branch
      %48 = sbr.rel (0) target = $region21
    $region20: #{tpu_custom_call.1} parent=1 // pred_region
      _
    $region21: #{tpu_custom_call.1} parent=1 // pred_fallthru
      _
    // Predicated region
    $region22: #{tpu_custom_call.1} parent=1 // pred_check
      _
    $region23: #{tpu_custom_call.1} parent=1 // pred_check_branch
      %50 = sbr.rel (0) target = $region25
    $region24: #{tpu_custom_call.1} parent=1 // pred_region
      %51 = dma.done [#allocation3], 256
    $region25: #{tpu_custom_call.1} parent=1 // pred_fallthru
      _
    // Predicated region
    $region26: #{tpu_custom_call.1} parent=1 // pred_check
      _
    $region27: #{tpu_custom_call.1} parent=1 // pred_check_branch
      %53 = sbr.rel (0) target = $region29
    $region28: #{tpu_custom_call.1} parent=1 // pred_region
      %54 = dma.done [#allocation6], 32
    $region29: #{tpu_custom_call.1} parent=1 // pred_fallthru
      _
    // Predicated region
    $region30: #{tpu_custom_call.1} parent=1 // pred_check
      _
    $region31: #{tpu_custom_call.1} parent=1 // pred_check_branch
      %56 = sbr.rel (0) target = $region33
    $region32: #{tpu_custom_call.1} parent=1 // pred_region
      %57 = dma.done [#allocation6], 8192
    $region33: #{tpu_custom_call.1} parent=1 // pred_fallthru
      _
    %v58 = vld [vmem:[#allocation2] sm:$0xff]
    %v59 = vld [vmem:[#allocation2 + $0x8] sm:$0xff]
    %v60 = vrot.slane %v58, 4
    %v61 = vadd.f32 %v58, %v60
    %v62 = vrot.slane %v61, 2
    %v63 = vadd.f32 %v61, %v62
    %v64 = vrot.slane %v63, 1
    %v65 = vadd.f32 %v63, %v64
    %v66 = vrot.slane %v59, 4
    %v67 = vadd.f32 %v59, %v66
    %v68 = vrot.slane %v67, 2
    %v69 = vadd.f32 %v67, %v68
    %v70 = vrot.slane %v69, 1
    %v71 = vadd.f32 %v69, %v70
    %v72 = vrcp.pop 8.0
    %v73 = vmul.f32 %v65, %v72
    %v74 = vmul.f32 %v71, %v72
    %v75 = vsub.f32 %v58, %v73
    %v76 = vsub.f32 %v59, %v74
    %v77 = vmul.f32 %v75, %v75
    %v78 = vmul.f32 %v76, %v76
    %v79 = vrot.slane %v77, 4
    %v80 = vadd.f32 %v77, %v79
    %v81 = vrot.slane %v80, 2
    %v82 = vadd.f32 %v80, %v81
    %v83 = vrot.slane %v82, 1
    %v84 = vadd.f32 %v82, %v83
    %v85 = vrot.slane %v78, 4
    %v86 = vadd.f32 %v78, %v85
    %v87 = vrot.slane %v86, 2
    %v88 = vadd.f32 %v86, %v87
    %v89 = vrot.slane %v88, 1
    %v90 = vadd.f32 %v88, %v89
    %v91 = vmul.f32 %v84, %v72
    %v92 = vmul.f32 %v90, %v72
    %v93 = vadd.f32 %v91, 1e-05
    %v94 = vadd.f32 %v92, 1e-05
    %v95 = vrsqrt.pop %v93
    %v96 = vrsqrt.pop %v94
    %v97 = vld [vmem:[%s1] sm:$0x3]
    %v99 = vlaneseq
    %v100 = vshrl.u32 %v99, 7
    %v101 = vsub.s32 0, %v100
    %v102 = vrot.slane %v97, %v101
    %v103 = vlaneseq
    %v104 = vshrl.u32 %v103, 7
    %v105 = vsub.s32 1, %v104
    %v106 = vrot.slane %v97, %v105
    %v109 = vmul.f32 %v95, %v102
    %v110 = vmul.f32 %v96, %v106
    %v111 = vld [vmem:[#allocation5] sm:$0x3]
    %v112 = vmul.f32 %v73, %v109
    %v113 = vmul.f32 %v74, %v110
    %v116 = vcombine.low %v112, %v113
    %v118 = vunpack.c.l.s4 1966171168
    %v119 = vunpack.c.0.s8 %v118
    %v120 = vlaneseq
    %v121 = vshrl.u32 %v120, 7
    %v122 = vsub.s32 %v119, %v121
    %v123 = vrot.slane %v116, %v122
    %v125 = vunpack.c.l.s4 1966171168
    %v126 = vunpack.c.0.s8 %v125
    %v127 = vlaneseq
    %v128 = vshrl.u32 %v127, 7
    %v129 = vsub.s32 %v126, %v128
    %v130 = vrot.slane %v123, %v129
    %v132 = vsub.f32 %v111, %v130
    %v133 = vlaneseq
    %v134 = vshrl.u32 %v133, 7
    %v135 = vsub.s32 0, %v134
    %v136 = vrot.slane %v109, %v135
    %v137 = vlaneseq
    %v138 = vshrl.u32 %v137, 7
    %v139 = vsub.s32 0, %v138
    %v140 = vrot.slane %v110, %v139
    %v141 = vmul.f32 %v58, %v136
    %v142 = vmul.f32 %v59, %v140
    %v144 = vlaneseq
    %v145 = vshrl.u32 %v144, 7
    %v146 = vsub.s32 0, %v145
    %v147 = vrot.slane %v132, %v146
    %v148 = vlaneseq
    %v149 = vshrl.u32 %v148, 7
    %v150 = vsub.s32 1, %v149
    %v151 = vrot.slane %v132, %v150
    %v154 = vadd.f32 %v141, %v147
    %v155 = vadd.f32 %v142, %v151
    %v156 = vpack.c.bf16 %v154, %v154
    %v157 = vpack.c.bf16 %v155, %v155
    %v158 = vld [vmem:[#allocation7] sm:$0xff]
    %v159 = vld [vmem:[#allocation7 + $0x8] sm:$0xff]
    %v160 = vld [vmem:[#allocation7 + $0x10] sm:$0xff]
    %v161 = vld [vmem:[#allocation7 + $0x18] sm:$0xff]
    %v162 = vld [vmem:[#allocation7 + $0x20] sm:$0xff]
    %v163 = vld [vmem:[#allocation7 + $0x28] sm:$0xff]
    %v164 = vld [vmem:[#allocation7 + $0x30] sm:$0xff]
    %v165 = vld [vmem:[#allocation7 + $0x38] sm:$0xff]
    %v166 = vld [vmem:[#allocation7 + $0x40] sm:$0xff]
    %v167 = vld [vmem:[#allocation7 + $0x48] sm:$0xff]
    %v168 = vld [vmem:[#allocation7 + $0x50] sm:$0xff]
    %v169 = vld [vmem:[#allocation7 + $0x58] sm:$0xff]
    %v170 = vld [vmem:[#allocation7 + $0x60] sm:$0xff]
    %v171 = vld [vmem:[#allocation7 + $0x68] sm:$0xff]
    %v172 = vld [vmem:[#allocation7 + $0x70] sm:$0xff]
    %v173 = vld [vmem:[#allocation7 + $0x78] sm:$0xff]
    %v174 = vld [vmem:[#allocation7 + $0x80] sm:$0xff]
    %v175 = vld [vmem:[#allocation7 + $0x88] sm:$0xff]
    %v176 = vld [vmem:[#allocation7 + $0x90] sm:$0xff]
    %v177 = vld [vmem:[#allocation7 + $0x98] sm:$0xff]
    %v178 = vld [vmem:[#allocation7 + $0xa0] sm:$0xff]
    %v179 = vld [vmem:[#allocation7 + $0xa8] sm:$0xff]
    %v180 = vld [vmem:[#allocation7 + $0xb0] sm:$0xff]
    %v181 = vld [vmem:[#allocation7 + $0xb8] sm:$0xff]
    %v182 = vld [vmem:[#allocation7 + $0xc0] sm:$0xff]
    %v183 = vld [vmem:[#allocation7 + $0xc8] sm:$0xff]
    %v184 = vld [vmem:[#allocation7 + $0xd0] sm:$0xff]
    %v185 = vld [vmem:[#allocation7 + $0xd8] sm:$0xff]
    %v186 = vld [vmem:[#allocation7 + $0xe0] sm:$0xff]
    %v187 = vld [vmem:[#allocation7 + $0xe8] sm:$0xff]
    %v188 = vld [vmem:[#allocation7 + $0xf0] sm:$0xff]
    %v189 = vld [vmem:[#allocation7 + $0xf8] sm:$0xff]
    %v190 = vld [vmem:[#allocation7 + $0x100] sm:$0xff]
    %v191 = vld [vmem:[#allocation7 + $0x108] sm:$0xff]
    %v192 = vld [vmem:[#allocation7 + $0x110] sm:$0xff]
    %v193 = vld [vmem:[#allocation7 + $0x118] sm:$0xff]
    %v194 = vld [vmem:[#allocation7 + $0x120] sm:$0xff]
    %v195 = vld [vmem:[#allocation7 + $0x128] sm:$0xff]
    %v196 = vld [vmem:[#allocation7 + $0x130] sm:$0xff]
    %v197 = vld [vmem:[#allocation7 + $0x138] sm:$0xff]
    %v198 = vld [vmem:[#allocation7 + $0x140] sm:$0xff]
    %v199 = vld [vmem:[#allocation7 + $0x148] sm:$0xff]
    %v200 = vld [vmem:[#allocation7 + $0x150] sm:$0xff]
    %v201 = vld [vmem:[#allocation7 + $0x158] sm:$0xff]
    %v202 = vld [vmem:[#allocation7 + $0x160] sm:$0xff]
    %v203 = vld [vmem:[#allocation7 + $0x168] sm:$0xff]
    %v204 = vld [vmem:[#allocation7 + $0x170] sm:$0xff]
    %v205 = vld [vmem:[#allocation7 + $0x178] sm:$0xff]
    %v206 = vld [vmem:[#allocation7 + $0x180] sm:$0xff]
    %v207 = vld [vmem:[#allocation7 + $0x188] sm:$0xff]
    %v208 = vld [vmem:[#allocation7 + $0x190] sm:$0xff]
    %v209 = vld [vmem:[#allocation7 + $0x198] sm:$0xff]
    %v210 = vld [vmem:[#allocation7 + $0x1a0] sm:$0xff]
    %v211 = vld [vmem:[#allocation7 + $0x1a8] sm:$0xff]
    %v212 = vld [vmem:[#allocation7 + $0x1b0] sm:$0xff]
    %v213 = vld [vmem:[#allocation7 + $0x1b8] sm:$0xff]
    %v214 = vld [vmem:[#allocation7 + $0x1c0] sm:$0xff]
    %v215 = vld [vmem:[#allocation7 + $0x1c8] sm:$0xff]
    %v216 = vld [vmem:[#allocation7 + $0x1d0] sm:$0xff]
    %v217 = vld [vmem:[#allocation7 + $0x1d8] sm:$0xff]
    %v218 = vld [vmem:[#allocation7 + $0x1e0] sm:$0xff]
    %v219 = vld [vmem:[#allocation7 + $0x1e8] sm:$0xff]
    %v220 = vld [vmem:[#allocation7 + $0x1f0] sm:$0xff]
    %v221 = vld [vmem:[#allocation7 + $0x1f8] sm:$0xff]
    %v222 = vld [vmem:[%s4] sm:$0xf]
    %v224 = vlaneseq
    %v225 = vshrl.u32 %v224, 7
    %v226 = vsub.s32 0, %v225
    %v227 = vrot.slane %v222, %v226
    %v228 = vlaneseq
    %v229 = vshrl.u32 %v228, 7
    %v230 = vsub.s32 1, %v229
    %v231 = vrot.slane %v222, %v230
    %v232 = vlaneseq
    %v233 = vshrl.u32 %v232, 7
    %v234 = vsub.s32 2, %v233
    %v235 = vrot.slane %v222, %v234
    %v236 = vlaneseq
    %v237 = vshrl.u32 %v236, 7
    %v238 = vsub.s32 3, %v237
    %v239 = vrot.slane %v222, %v238
    %v308 = vunpack.c.l.b16 %v158
    %v309 = vunpack.c.h.b16 %v158
    %v310 = vunpack.c.l.b16 %v159
    %v311 = vunpack.c.h.b16 %v159
    %v312 = vunpack.c.l.b16 %v160
    %v313 = vunpack.c.h.b16 %v160
    %v314 = vunpack.c.l.b16 %v161
    %v315 = vunpack.c.h.b16 %v161
    %v316 = vunpack.c.l.b16 %v162
    %v317 = vunpack.c.h.b16 %v162
    %v318 = vunpack.c.l.b16 %v163
    %v319 = vunpack.c.h.b16 %v163
    %v320 = vunpack.c.l.b16 %v164
    %v321 = vunpack.c.h.b16 %v164
    %v322 = vunpack.c.l.b16 %v165
    %v323 = vunpack.c.h.b16 %v165
    %v324 = vunpack.c.l.b16 %v166
    %v325 = vunpack.c.h.b16 %v166
    %v326 = vunpack.c.l.b16 %v167
    %v327 = vunpack.c.h.b16 %v167
    %v328 = vunpack.c.l.b16 %v168
    %v329 = vunpack.c.h.b16 %v168
    %v330 = vunpack.c.l.b16 %v169
    %v331 = vunpack.c.h.b16 %v169
    %v332 = vunpack.c.l.b16 %v170
    %v333 = vunpack.c.h.b16 %v170
    %v334 = vunpack.c.l.b16 %v171
    %v335 = vunpack.c.h.b16 %v171
    %v336 = vunpack.c.l.b16 %v172
    %v337 = vunpack.c.h.b16 %v172
    %v338 = vunpack.c.l.b16 %v173
    %v339 = vunpack.c.h.b16 %v173
    %v340 = vunpack.c.l.b16 %v174
    %v341 = vunpack.c.h.b16 %v174
    %v342 = vunpack.c.l.b16 %v175
    %v343 = vunpack.c.h.b16 %v175
    %v344 = vunpack.c.l.b16 %v176
    %v345 = vunpack.c.h.b16 %v176
    %v346 = vunpack.c.l.b16 %v177
    %v347 = vunpack.c.h.b16 %v177
    %v348 = vunpack.c.l.b16 %v178
    %v349 = vunpack.c.h.b16 %v178
    %v350 = vunpack.c.l.b16 %v179
    %v351 = vunpack.c.h.b16 %v179
    %v352 = vunpack.c.l.b16 %v180
    %v353 = vunpack.c.h.b16 %v180
    %v354 = vunpack.c.l.b16 %v181
    %v355 = vunpack.c.h.b16 %v181
    %v356 = vunpack.c.l.b16 %v182
    %v357 = vunpack.c.h.b16 %v182
    %v358 = vunpack.c.l.b16 %v183
    %v359 = vunpack.c.h.b16 %v183
    %v360 = vunpack.c.l.b16 %v184
    %v361 = vunpack.c.h.b16 %v184
    %v362 = vunpack.c.l.b16 %v185
    %v363 = vunpack.c.h.b16 %v185
    %v364 = vunpack.c.l.b16 %v186
    %v365 = vunpack.c.h.b16 %v186
    %v366 = vunpack.c.l.b16 %v187
    %v367 = vunpack.c.h.b16 %v187
    %v368 = vunpack.c.l.b16 %v188
    %v369 = vunpack.c.h.b16 %v188
    %v370 = vunpack.c.l.b16 %v189
    %v371 = vunpack.c.h.b16 %v189
    %v372 = vunpack.c.l.b16 %v190
    %v373 = vunpack.c.h.b16 %v190
    %v374 = vunpack.c.l.b16 %v191
    %v375 = vunpack.c.h.b16 %v191
    %v376 = vunpack.c.l.b16 %v192
    %v377 = vunpack.c.h.b16 %v192
    %v378 = vunpack.c.l.b16 %v193
    %v379 = vunpack.c.h.b16 %v193
    %v380 = vunpack.c.l.b16 %v194
    %v381 = vunpack.c.h.b16 %v194
    %v382 = vunpack.c.l.b16 %v195
    %v383 = vunpack.c.h.b16 %v195
    %v384 = vunpack.c.l.b16 %v196
    %v385 = vunpack.c.h.b16 %v196
    %v386 = vunpack.c.l.b16 %v197
    %v387 = vunpack.c.h.b16 %v197
    %v388 = vunpack.c.l.b16 %v198
    %v389 = vunpack.c.h.b16 %v198
    %v390 = vunpack.c.l.b16 %v199
    %v391 = vunpack.c.h.b16 %v199
    %v392 = vunpack.c.l.b16 %v200
    %v393 = vunpack.c.h.b16 %v200
    %v394 = vunpack.c.l.b16 %v201
    %v395 = vunpack.c.h.b16 %v201
    %v396 = vunpack.c.l.b16 %v202
    %v397 = vunpack.c.h.b16 %v202
    %v398 = vunpack.c.l.b16 %v203
    %v399 = vunpack.c.h.b16 %v203
    %v400 = vunpack.c.l.b16 %v204
    %v401 = vunpack.c.h.b16 %v204
    %v402 = vunpack.c.l.b16 %v205
    %v403 = vunpack.c.h.b16 %v205
    %v404 = vunpack.c.l.b16 %v206
    %v405 = vunpack.c.h.b16 %v206
    %v406 = vunpack.c.l.b16 %v207
    %v407 = vunpack.c.h.b16 %v207
    %v408 = vunpack.c.l.b16 %v208
    %v409 = vunpack.c.h.b16 %v208
    %v410 = vunpack.c.l.b16 %v209
    %v411 = vunpack.c.h.b16 %v209
    %v412 = vunpack.c.l.b16 %v210
    %v413 = vunpack.c.h.b16 %v210
    %v414 = vunpack.c.l.b16 %v211
    %v415 = vunpack.c.h.b16 %v211
    %v416 = vunpack.c.l.b16 %v212
    %v417 = vunpack.c.h.b16 %v212
    %v418 = vunpack.c.l.b16 %v213
    %v419 = vunpack.c.h.b16 %v213
    %v420 = vunpack.c.l.b16 %v214
    %v421 = vunpack.c.h.b16 %v214
    %v422 = vunpack.c.l.b16 %v215
    %v423 = vunpack.c.h.b16 %v215
    %v424 = vunpack.c.l.b16 %v216
    %v425 = vunpack.c.h.b16 %v216
    %v426 = vunpack.c.l.b16 %v217
    %v427 = vunpack.c.h.b16 %v217
    %v428 = vunpack.c.l.b16 %v218
    %v429 = vunpack.c.h.b16 %v218
    %v430 = vunpack.c.l.b16 %v219
    %v431 = vunpack.c.h.b16 %v219
    %v432 = vunpack.c.l.b16 %v220
    %v433 = vunpack.c.h.b16 %v220
    %v434 = vunpack.c.l.b16 %v221
    %v435 = vunpack.c.h.b16 %v221
    %v436 = vpack.c.b16 %v312, %v308
    %v437 = vpack.c.b16 %v313, %v309
    %v438 = vpack.c.b16 %v314, %v310
    %v439 = vpack.c.b16 %v315, %v311
    %v440 = vpack.c.b16 %v320, %v316
    %v441 = vpack.c.b16 %v321, %v317
    %v442 = vpack.c.b16 %v322, %v318
    %v443 = vpack.c.b16 %v323, %v319
    %v444 = vpack.c.b16 %v328, %v324
    %v445 = vpack.c.b16 %v329, %v325
    %v446 = vpack.c.b16 %v330, %v326
    %v447 = vpack.c.b16 %v331, %v327
    %v448 = vpack.c.b16 %v336, %v332
    %v449 = vpack.c.b16 %v337, %v333
    %v450 = vpack.c.b16 %v338, %v334
    %v451 = vpack.c.b16 %v339, %v335
    %v452 = vpack.c.b16 %v344, %v340
    %v453 = vpack.c.b16 %v345, %v341
    %v454 = vpack.c.b16 %v346, %v342
    %v455 = vpack.c.b16 %v347, %v343
    %v456 = vpack.c.b16 %v352, %v348
    %v457 = vpack.c.b16 %v353, %v349
    %v458 = vpack.c.b16 %v354, %v350
    %v459 = vpack.c.b16 %v355, %v351
    %v460 = vpack.c.b16 %v360, %v356
    %v461 = vpack.c.b16 %v361, %v357
    %v462 = vpack.c.b16 %v362, %v358
    %v463 = vpack.c.b16 %v363, %v359
    %v464 = vpack.c.b16 %v368, %v364
    %v465 = vpack.c.b16 %v369, %v365
    %v466 = vpack.c.b16 %v370, %v366
    %v467 = vpack.c.b16 %v371, %v367
    %v468 = vpack.c.b16 %v376, %v372
    %v469 = vpack.c.b16 %v377, %v373
    %v470 = vpack.c.b16 %v378, %v374
    %v471 = vpack.c.b16 %v379, %v375
    %v472 = vpack.c.b16 %v384, %v380
    %v473 = vpack.c.b16 %v385, %v381
    %v474 = vpack.c.b16 %v386, %v382
    %v475 = vpack.c.b16 %v387, %v383
    %v476 = vpack.c.b16 %v392, %v388
    %v477 = vpack.c.b16 %v393, %v389
    %v478 = vpack.c.b16 %v394, %v390
    %v479 = vpack.c.b16 %v395, %v391
    %v480 = vpack.c.b16 %v400, %v396
    %v481 = vpack.c.b16 %v401, %v397
    %v482 = vpack.c.b16 %v402, %v398
    %v483 = vpack.c.b16 %v403, %v399
    %v484 = vpack.c.b16 %v408, %v404
    %v485 = vpack.c.b16 %v409, %v405
    %v486 = vpack.c.b16 %v410, %v406
    %v487 = vpack.c.b16 %v411, %v407
    %v488 = vpack.c.b16 %v416, %v412
    %v489 = vpack.c.b16 %v417, %v413
    %v490 = vpack.c.b16 %v418, %v414
    %v491 = vpack.c.b16 %v419, %v415
    %v492 = vpack.c.b16 %v424, %v420
    %v493 = vpack.c.b16 %v425, %v421
    %v494 = vpack.c.b16 %v426, %v422
    %v495 = vpack.c.b16 %v427, %v423
    %v496 = vpack.c.b16 %v432, %v428
    %v497 = vpack.c.b16 %v433, %v429
    %v498 = vpack.c.b16 %v434, %v430
    %v499 = vpack.c.b16 %v435, %v431
    %564 = vmatprep.subr.bf16.mxu0 %v437
    %565 = vmatpush1.bf16.msra.mxu0 %v436
    %566 = vmatprep.subr.bf16.mxu0 %v441
    %567 = vmatpush1.bf16.msra.mxu0 %v440
    %568 = vmatprep.subr.bf16.mxu0 %v445
    %569 = vmatpush1.bf16.msra.mxu0 %v444
    %570 = vmatprep.subr.bf16.mxu0 %v449
    %571 = vmatpush1.bf16.msra.mxu0 %v448
    %572 = vmatprep.subr.bf16.mxu0 %v453
    %573 = vmatpush1.bf16.msra.mxu0 %v452
    %574 = vmatprep.subr.bf16.mxu0 %v457
    %575 = vmatpush1.bf16.msra.mxu0 %v456
    %576 = vmatprep.subr.bf16.mxu0 %v461
    %577 = vmatpush1.bf16.msra.mxu0 %v460
    %578 = vmatprep.subr.bf16.mxu0 %v465
    %579 = vmatpush1.bf16.msra.mxu0 %v464
    %580 = vmatprep.subr.bf16.mxu0 %v469
    %581 = vmatpush1.bf16.msra.mxu0 %v468
    %582 = vmatprep.subr.bf16.mxu0 %v473
    %583 = vmatpush1.bf16.msra.mxu0 %v472
    %584 = vmatprep.subr.bf16.mxu0 %v477
    %585 = vmatpush1.bf16.msra.mxu0 %v476
    %586 = vmatprep.subr.bf16.mxu0 %v481
    %587 = vmatpush1.bf16.msra.mxu0 %v480
    %588 = vmatprep.subr.bf16.mxu0 %v485
    %589 = vmatpush1.bf16.msra.mxu0 %v484
    %590 = vmatprep.subr.bf16.mxu0 %v489
    %591 = vmatpush1.bf16.msra.mxu0 %v488
    %592 = vmatprep.subr.bf16.mxu0 %v493
    %593 = vmatpush1.bf16.msra.mxu0 %v492
    %594 = vmatprep.subr.bf16.mxu0 %v497
    %595 = vmatpush1.bf16.msra.mxu0 %v496
    %596 = vmatprep.mubr.bf16.mxu0 %v157
    %597 = vmatmul.mubr.bf16.gmra.mrb[0].mxu0 %v156
    %v598 = vpop.f32.mrb[0].mxu0
    %v599 = vadd.f32 %v227, %v598
    %v600 = vpop.f32.mrb[0].mxu0
    %v601 = vadd.f32 %v231, %v600
    %v602 = vpop.f32.mrb[0].mxu0
    %v603 = vpop.f32.mrb[0].mxu0
    %604 = vdwg.mxu0
    %605 = vmatprep.subr.bf16.mxu0 %v439
    %606 = vmatpush1.bf16.msra.mxu0 %v438
    %607 = vmatprep.subr.bf16.mxu0 %v443
    %608 = vmatpush1.bf16.msra.mxu0 %v442
    %609 = vmatprep.subr.bf16.mxu0 %v447
    %610 = vmatpush1.bf16.msra.mxu0 %v446
    %611 = vmatprep.subr.bf16.mxu0 %v451
    %612 = vmatpush1.bf16.msra.mxu0 %v450
    %613 = vmatprep.subr.bf16.mxu0 %v455
    %614 = vmatpush1.bf16.msra.mxu0 %v454
    %615 = vmatprep.subr.bf16.mxu0 %v459
    %616 = vmatpush1.bf16.msra.mxu0 %v458
    %617 = vmatprep.subr.bf16.mxu0 %v463
    %618 = vmatpush1.bf16.msra.mxu0 %v462
    %619 = vmatprep.subr.bf16.mxu0 %v467
    %620 = vmatpush1.bf16.msra.mxu0 %v466
    %621 = vmatprep.subr.bf16.mxu0 %v471
    %622 = vmatpush1.bf16.msra.mxu0 %v470
    %623 = vmatprep.subr.bf16.mxu0 %v475
    %624 = vmatpush1.bf16.msra.mxu0 %v474
    %625 = vmatprep.subr.bf16.mxu0 %v479
    %626 = vmatpush1.bf16.msra.mxu0 %v478
    %627 = vmatprep.subr.bf16.mxu0 %v483
    %628 = vmatpush1.bf16.msra.mxu0 %v482
    %629 = vmatprep.subr.bf16.mxu0 %v487
    %630 = vmatpush1.bf16.msra.mxu0 %v486
    %631 = vmatprep.subr.bf16.mxu0 %v491
    %632 = vmatpush1.bf16.msra.mxu0 %v490
    %633 = vmatprep.subr.bf16.mxu0 %v495
    %634 = vmatpush1.bf16.msra.mxu0 %v494
    %635 = vmatprep.subr.bf16.mxu0 %v499
    %636 = vmatpush1.bf16.msra.mxu0 %v498
    %637 = vmatprep.mubr.bf16.mxu0 %v157
    %638 = vmatmul.mubr.bf16.gmra.mrb[0].mxu0 %v156
    %v639 = vpop.f32.mrb[0].mxu0
    %v640 = vadd.f32 %v235, %v639
    %v641 = vpop.f32.mrb[0].mxu0
    %v642 = vadd.f32 %v239, %v641
    %v643 = vpop.f32.mrb[0].mxu0
    %v644 = vpop.f32.mrb[0].mxu0
    %645 = vdwg.mxu0
    %v646 = vmax.f32 %v599, 0.0
    %v647 = vmax.f32 %v601, 0.0
    %v648 = vmax.f32 %v640, 0.0
    %v649 = vmax.f32 %v642, 0.0
    %650 = vst [vmem:[#allocation8] sm:$0xff] %v646
    %651 = vst [vmem:[#allocation8 + $0x8] sm:$0xff] %v647
    %652 = vst [vmem:[#allocation8 + $0x10] sm:$0xff] %v648
    %653 = vst [vmem:[#allocation8 + $0x18] sm:$0xff] %v649
    // Predicated region
    $region34: #{tpu_custom_call.1} parent=1 // pred_check
      _
    $region35: #{tpu_custom_call.1} parent=1 // pred_check_branch
      %655 = sbr.rel (0) target = $region37
    $region36: #{tpu_custom_call.1} parent=1 // pred_region
      %s657 = ssub.s32 512, 512
      %658 = vsyncadd [#allocation4], %s657
      %s660 = sshll.u32 [#allocation8], 4
      %s661 = int_to_ptr.vmem [resolvable:$true] %s660
      %663 = dma.vmem_to_hbm [thread:$0]  %s661, 512, %s5, [#allocation4]
    $region37: #{tpu_custom_call.1} parent=1 // pred_fallthru
      _
    // Predicated region
    $region38: #{tpu_custom_call.1} parent=1 // pred_check
      _
    $region39: #{tpu_custom_call.1} parent=1 // pred_check_branch
      %665 = sbr.rel (0) target = $region41
    $region40: #{tpu_custom_call.1} parent=1 // pred_region
      %666 = dma.done [#allocation4], 512
    $region41: #{tpu_custom_call.1} parent=1 // pred_fallthru
      _
    %667 = vsyncpa [#allocation3], 1
    %668 = vsyncpa [#allocation6], 1
    %669 = vsyncpa [#allocation4], 1

</llo_original>
